<compile_context>
chip_gen: v6e
topology: v6e:2x2x1
jax: 0.10.0
libtpu: 0.0.40
codegen_flags: <defaults>
</compile_context>

<pallas_src>
import functools

import jax
import jax.numpy as jnp
from jax.experimental import pallas as pl
from jax.experimental.pallas import tpu as pltpu

_LANE = 128       # lane width: pad output-feature dims to multiples of this
_SUBLANE = 8      # fp32 sublane tile: pad batch tiles to multiples of this
_ROW_ALIGN = 16   # bf16 sublane-pack tile: row alignment inside the packed params


def _round_up(n, m):
    return ((n + m - 1) // m) * m


def _cdiv(a, b):
    return (a + b - 1) // b


def _fused_mlp_kernel(x_ref, p_ref, o_ref, *, layer_meta):
    """Fused MLP: x -> relu(L1) -> ... -> L_last, all inside one kernel.

    x_ref : (bm, in_pad)            VMEM, fp32
    p_ref : (total_rows, w_max)     VMEM, packed params (bf16 or fp32)
            per layer: [K_pad rows of W^T (in,out)] then [16 rows, bias in row 0]
    o_ref : (bm, out_pad)           VMEM, fp32
    layer_meta: static tuple of (row_offset, k_pad, n_pad) per layer.
    """
    num_layers = len(layer_meta)
    acc = x_ref[...].astype(jnp.float32)
    for i, (row, k_pad, n_pad) in enumerate(layer_meta):
        # Static, tile-aligned views into the packed parameter buffer.
        w = p_ref[row:row + k_pad, :n_pad]                                   # (k_pad, n_pad)
        b = p_ref[row + k_pad:row + k_pad + 1, :n_pad].astype(jnp.float32)  # (1, n_pad)
        # bf16 (or fp32) MXU inputs, fp32 accumulation.
        acc = jnp.dot(acc.astype(w.dtype), w,
                      preferred_element_type=jnp.float32) + b
        if i < num_layers - 1:
            acc = jnp.maximum(acc, 0.0)   # fp32 epilogue (v5e-safe) — keep fp32
    o_ref[...] = acc.astype(o_ref.dtype)


def _mlp_forward(x, packed, *, layer_meta, output_dim, in_pad, out_pad,
                 batch_tile, single_buffer_params):
    """Run the fused MLP on a (B, D_in) fp32 input."""
    B, D_in = x.shape

    # Balanced batch tiling; >= 2 tiles once B >= 16 so the "parallel" axis can
    # shard across v7x's two TensorCores (no-op on 1-TC v5e/v6e, and B=8 stays
    # a single grid step with zero extra cost).
    if B >= 16:
        num_tiles = max(2, _cdiv(B, batch_tile))
    else:
        num_tiles = 1
    bm = _round_up(_cdiv(B, num_tiles), _SUBLANE)
    B_pad = num_tiles * bm

    # Only emit a pad op if actually needed (not at the default test shape).
    if (B_pad, in_pad) != (B, D_in):
        x = jnp.pad(x, ((0, B_pad - B), (0, in_pad - D_in)))

    kernel = functools.partial(_fused_mlp_kernel, layer_meta=layer_meta)

    # Packed params: one full-array block, resident across all batch tiles.
    # Single-buffer it (fetched once) to halve its VMEM footprint.
    param_spec_kwargs = {"pipeline_mode": pl.Buffered(1)} if single_buffer_params else {}
    grid_spec = pl.GridSpec(
        grid=(num_tiles,),
        in_specs=[
            pl.BlockSpec((bm, in_pad), lambda i: (i, 0)),
            pl.BlockSpec(packed.shape, lambda i: (0, 0), **param_spec_kwargs),
        ],
        out_specs=pl.BlockSpec((bm, out_pad), lambda i: (i, 0)),
    )

    out = pl.pallas_call(
        kernel,
        out_shape=jax.ShapeDtypeStruct((B_pad, out_pad), x.dtype),
        grid_spec=grid_spec,
        compiler_params=pltpu.CompilerParams(
            dimension_semantics=("parallel",),
        ),
    )(x, packed)

    return out[:B, :output_dim]


class MLP:
    """JAX/Pallas re-implementation of the PyTorch MLP (FFN).

    forward: x -> relu(L1(x)) -> relu(L2(.)) -> ... -> L_last(.)
    """

    def __init__(self, input_dim, hidden_dim, output_dim, num_layers, key,
                 param_dtype=jnp.bfloat16, batch_tile=128):
        self.num_layers = num_layers
        self.output_dim = output_dim
        self.param_dtype = param_dtype

        h = [hidden_dim] * (num_layers - 1)
        dims = list(zip([input_dim] + h, h + [output_dim]))   # (d_in, d_out) per layer

        # One packed parameter buffer: per layer
        #   [K_pad rows : W^T zero-padded to (K_pad, w_max)]
        #   [16 rows    : bias in row 0, zero elsewhere]
        # All row offsets / counts are multiples of 16 -> tile-aligned slices
        # for both fp32 (8,128) and bf16 (16,128) layouts.
        w_max = max(_round_up(d_out, _LANE) for (_, d_out) in dims)

        self.params = []        # PyTorch-convention (out, in) / (out,) — reference only
        blocks = []
        layer_meta = []
        row = 0
        for li, (d_in, d_out) in enumerate(dims):
            key, kw, kb = jax.random.split(key, 3)
            # Deterministic init mimicking nn.Linear default (uniform +/- 1/sqrt(d_in)).
            bound = 1.0 / (d_in ** 0.5)
            w = jax.random.uniform(kw, (d_out, d_in), jnp.float32, -bound, bound)
            b = jax.random.uniform(kb, (d_out,), jnp.float32, -bound, bound)
            self.params.append((w, b))

            n_pad = _round_up(d_out, _LANE)
            # Layer 0 contraction dim only needs row-alignment (no 128 padding);
            # later layers must match the previous layer's padded output width.
            k_pad = _round_up(d_in, _LANE) if li > 0 else _round_up(d_in, _ROW_ALIGN)

            w_blk = (jnp.zeros((k_pad, w_max), param_dtype)
                     .at[:d_in, :d_out].set(w.T.astype(param_dtype)))
            b_blk = (jnp.zeros((_ROW_ALIGN, w_max), param_dtype)
                     .at[0, :d_out].set(b.astype(param_dtype)))
            blocks += [w_blk, b_blk]

            layer_meta.append((row, k_pad, n_pad))
            row += k_pad + _ROW_ALIGN

        self.packed = jnp.concatenate(blocks, axis=0)
        self.layer_meta = tuple(layer_meta)
        self.in_pad = layer_meta[0][1]
        self.out_pad = layer_meta[-1][2]

        fwd = functools.partial(
            _mlp_forward,
            layer_meta=self.layer_meta,
            output_dim=output_dim,
            in_pad=self.in_pad,
            out_pad=self.out_pad,
            batch_tile=batch_tile,
        )
        self._forward_single_buf = jax.jit(functools.partial(fwd, single_buffer_params=True))
        self._forward_double_buf = jax.jit(functools.partial(fwd, single_buffer_params=False))
        self._forward = self._forward_single_buf

    def __call__(self, x):
        try:
            return self._forward(x, self.packed)
        except Exception:
            # Fallback if this JAX build rejects pl.Buffered(1) on a BlockSpec;
            # semantics are identical, only the weight buffer is double-buffered.
            if self._forward is self._forward_single_buf:
                self._forward = self._forward_double_buf
                return self._forward(x, self.packed)
            raise


def _reference(x, params, num_layers):
    """Plain-JAX fp32 reference (PyTorch-convention params)."""
    for i, (w, b) in enumerate(params):
        x = x @ w.T + b
        if i < num_layers - 1:
            x = jnp.maximum(x, 0.0)
    return x


def _reference_matched(x, params, num_layers, param_dtype):
    """Reference that mimics the kernel's bf16-input / fp32-accumulate numerics."""
    acc = x.astype(jnp.float32)
    for i, (w, b) in enumerate(params):
        wq = w.T.astype(param_dtype)
        bq = b.astype(param_dtype).astype(jnp.float32)
        acc = jnp.dot(acc.astype(param_dtype), wq,
                      preferred_element_type=jnp.float32) + bq
        if i < num_layers - 1:
            acc = jnp.maximum(acc, 0.0)
    return acc


if __name__ == "__main__":
    key = jax.random.PRNGKey(0)
    k_in, k_model = jax.random.split(key)

    batch = 8
    input_dim = 32
    hidden_dim = 64
    output_dim = 16
    num_layers = 3

    x = jax.random.normal(k_in, (batch, input_dim), jnp.float32)

    # Default production path: bf16 MXU inputs, fp32 accumulation + epilogue.
    mlp_bf16 = MLP(input_dim, hidden_dim, output_dim, num_layers, k_model,
                   param_dtype=jnp.bfloat16)
    out_bf16 = jax.block_until_ready(mlp_bf16(x))

    # fp32 parameter path, used for the strict correctness check.
    mlp_f32 = MLP(input_dim, hidden_dim, output_dim, num_layers, k_model,
                  param_dtype=jnp.float32)
    out_f32 = jax.block_until_ready(mlp_f32(x))

    ref_f32 = _reference(x, mlp_f32.params, num_layers)
    ref_bf16 = _reference_matched(x, mlp_bf16.params, num_layers, jnp.bfloat16)

    assert out_bf16.shape == (batch, output_dim)
    assert out_f32.shape == (batch, output_dim)
    assert jnp.allclose(out_f32, ref_f32, atol=1e-5, rtol=1e-5), "fp32 mismatch vs reference"
    assert jnp.allclose(out_bf16, ref_bf16, atol=1e-3, rtol=1e-3), "bf16 mismatch vs matched reference"
    assert jnp.allclose(out_bf16, ref_f32, atol=5e-2, rtol=5e-2), "bf16 drifted too far from fp32"

    # Exercise the multi-tile (grid > 1, padded batch) path as well.
    x2 = jax.random.normal(jax.random.PRNGKey(1), (20, input_dim), jnp.float32)
    out2 = jax.block_until_ready(mlp_f32(x2))
    ref2 = _reference(x2, mlp_f32.params, num_layers)
    assert out2.shape == (20, output_dim)
    assert jnp.allclose(out2, ref2, atol=1e-5, rtol=1e-5), "multi-tile fp32 mismatch"

    print("KERNEL_OK")
</pallas_src>

<mosaic_0001>
module attributes {stable_mosaic.version = 11 : i64} {
  func.func @_fused_mlp_kernel(%arg0: i32, %arg1: memref<8x32xf32, #tpu.memory_space<vmem>>, %arg2: memref<336x128xbf16, #tpu.memory_space<vmem>>, %arg3: memref<8x128xf32, #tpu.memory_space<vmem>>) attributes {dimension_semantics = [#tpu.dimension_semantics<parallel>], iteration_bounds = array<i64: 1>, scalar_prefetch = 0 : i64, scratch_operands = 0 : i64, tpu.core_type = #tpu.core_type<tc>, window_params = [{transform_indices = @transform_0, window_bounds = array<i64: 8, 32>}, {pipeline_mode = #tpu.pipeline_mode<synchronous>, transform_indices = @transform_1, window_bounds = array<i64: 336, 128>}, {transform_indices = @transform_2, window_bounds = array<i64: 8, 128>}]} {
    %c0 = arith.constant 0 : index
    %c0_0 = arith.constant 0 : index
    %0 = vector.load %arg1[%c0, %c0_0] : memref<8x32xf32, #tpu.memory_space<vmem>>, vector<8x32xf32>
    %c0_1 = arith.constant 0 : index
    %c0_2 = arith.constant 0 : index
    %1 = vector.load %arg2[%c0_1, %c0_2] : memref<336x128xbf16, #tpu.memory_space<vmem>>, vector<32x128xbf16>
    %c32 = arith.constant 32 : index
    %c0_3 = arith.constant 0 : index
    %2 = vector.load %arg2[%c32, %c0_3] : memref<336x128xbf16, #tpu.memory_space<vmem>>, vector<1x128xbf16>
    %3 = arith.extf %2 : vector<1x128xbf16> to vector<1x128xf32>
    %4 = arith.truncf %0 : vector<8x32xf32> to vector<8x32xbf16>
    %cst = arith.constant dense<0.000000e+00> : vector<8x128xf32>
    %5 = tpu.matmul %4, %1, %cst {dimension_numbers = #tpu.dot_dimension_numbers<[1], [0], [0], [1], [0, 0, 1, 1], [], []>} : vector<8x32xbf16>, vector<32x128xbf16>, vector<8x128xf32> -> vector<8x128xf32>
    %6 = vector.broadcast %3 : vector<1x128xf32> to vector<8x128xf32>
    %7 = arith.addf %5, %6 : vector<8x128xf32>
    %cst_4 = arith.constant 0.000000e+00 : f32
    %8 = vector.broadcast %cst_4 : f32 to vector<8x128xf32>
    %9 = arith.maximumf %7, %8 : vector<8x128xf32>
    %c48 = arith.constant 48 : index
    %c0_5 = arith.constant 0 : index
    %10 = vector.load %arg2[%c48, %c0_5] : memref<336x128xbf16, #tpu.memory_space<vmem>>, vector<128x128xbf16>
    %c176 = arith.constant 176 : index
    %c0_6 = arith.constant 0 : index
    %11 = vector.load %arg2[%c176, %c0_6] : memref<336x128xbf16, #tpu.memory_space<vmem>>, vector<1x128xbf16>
    %12 = arith.extf %11 : vector<1x128xbf16> to vector<1x128xf32>
    %13 = arith.truncf %9 : vector<8x128xf32> to vector<8x128xbf16>
    %cst_7 = arith.constant dense<0.000000e+00> : vector<8x128xf32>
    %14 = tpu.matmul %13, %10, %cst_7 {dimension_numbers = #tpu.dot_dimension_numbers<[1], [0], [0], [1], [0, 0, 1, 1], [], []>} : vector<8x128xbf16>, vector<128x128xbf16>, vector<8x128xf32> -> vector<8x128xf32>
    %15 = vector.broadcast %12 : vector<1x128xf32> to vector<8x128xf32>
    %16 = arith.addf %14, %15 : vector<8x128xf32>
    %cst_8 = arith.constant 0.000000e+00 : f32
    %17 = vector.broadcast %cst_8 : f32 to vector<8x128xf32>
    %18 = arith.maximumf %16, %17 : vector<8x128xf32>
    %c192 = arith.constant 192 : index
    %c0_9 = arith.constant 0 : index
    %19 = vector.load %arg2[%c192, %c0_9] : memref<336x128xbf16, #tpu.memory_space<vmem>>, vector<128x128xbf16>
    %c320 = arith.constant 320 : index
    %c0_10 = arith.constant 0 : index
    %20 = vector.load %arg2[%c320, %c0_10] : memref<336x128xbf16, #tpu.memory_space<vmem>>, vector<1x128xbf16>
    %21 = arith.extf %20 : vector<1x128xbf16> to vector<1x128xf32>
    %22 = arith.truncf %18 : vector<8x128xf32> to vector<8x128xbf16>
    %cst_11 = arith.constant dense<0.000000e+00> : vector<8x128xf32>
    %23 = tpu.matmul %22, %19, %cst_11 {dimension_numbers = #tpu.dot_dimension_numbers<[1], [0], [0], [1], [0, 0, 1, 1], [], []>} : vector<8x128xbf16>, vector<128x128xbf16>, vector<8x128xf32> -> vector<8x128xf32>
    %24 = vector.broadcast %21 : vector<1x128xf32> to vector<8x128xf32>
    %25 = arith.addf %23, %24 : vector<8x128xf32>
    %c0_12 = arith.constant 0 : index
    %c0_13 = arith.constant 0 : index
    %26 = vector.load %arg3[%c0_12, %c0_13] : memref<8x128xf32, #tpu.memory_space<vmem>>, vector<8x128xf32>
    tpu.vector_store %arg3[%c0_12, %c0_13], %25 {strides = array<i32>} : memref<8x128xf32, #tpu.memory_space<vmem>>, vector<8x128xf32>,
    return
  }
  func.func @transform_0(%arg0: i32) -> (i32, i32) {
    %c0_i32 = arith.constant 0 : i32
    %c0_i32_0 = arith.constant 0 : i32
    return %arg0, %c0_i32 : i32, i32
  }
  func.func @transform_1(%arg0: i32) -> (i32, i32) {
    %c0_i32 = arith.constant 0 : i32
    %c0_i32_0 = arith.constant 0 : i32
    %c0_i32_1 = arith.constant 0 : i32
    return %c0_i32, %c0_i32_0 : i32, i32
  }
  func.func @transform_2(%arg0: i32) -> (i32, i32) {
    %c0_i32 = arith.constant 0 : i32
    %c0_i32_0 = arith.constant 0 : i32
    return %arg0, %c0_i32 : i32, i32
  }
}

module attributes {stable_mosaic.version = 11 : i64} {
  func.func @_fused_mlp_kernel(%arg0: i32, %arg1: memref<8x32xf32, #tpu.memory_space<vmem>>, %arg2: memref<336x128xbf16, #tpu.memory_space<vmem>>, %arg3: memref<8x128xf32, #tpu.memory_space<vmem>>) attributes {dimension_semantics = [#tpu.dimension_semantics<parallel>], iteration_bounds = array<i64: 1>, scalar_prefetch = 0 : i64, scratch_operands = 0 : i64, tpu.core_type = #tpu.core_type<tc>, window_params = [{transform_indices = @transform_0, window_bounds = array<i64: 8, 32>}, {pipeline_mode = #tpu.pipeline_mode<synchronous>, transform_indices = @transform_1, window_bounds = array<i64: 336, 128>}, {transform_indices = @transform_2, window_bounds = array<i64: 8, 128>}]} {
    %c0 = arith.constant 0 : index
    %c0_0 = arith.constant 0 : index
    %0 = vector.load %arg1[%c0, %c0_0] : memref<8x32xf32, #tpu.memory_space<vmem>>, vector<8x32xf32>
    %c0_1 = arith.constant 0 : index
    %c0_2 = arith.constant 0 : index
    %1 = vector.load %arg2[%c0_1, %c0_2] : memref<336x128xbf16, #tpu.memory_space<vmem>>, vector<32x128xbf16>
    %c32 = arith.constant 32 : index
    %c0_3 = arith.constant 0 : index
    %2 = vector.load %arg2[%c32, %c0_3] : memref<336x128xbf16, #tpu.memory_space<vmem>>, vector<1x128xbf16>
    %3 = arith.extf %2 : vector<1x128xbf16> to vector<1x128xf32>
    %4 = arith.truncf %0 : vector<8x32xf32> to vector<8x32xbf16>
    %cst = arith.constant dense<0.000000e+00> : vector<8x128xf32>
    %5 = tpu.matmul %4, %1, %cst {dimension_numbers = #tpu.dot_dimension_numbers<[1], [0], [0], [1], [0, 0, 1, 1], [], []>} : vector<8x32xbf16>, vector<32x128xbf16>, vector<8x128xf32> -> vector<8x128xf32>
    %6 = vector.broadcast %3 : vector<1x128xf32> to vector<8x128xf32>
    %7 = arith.addf %5, %6 : vector<8x128xf32>
    %cst_4 = arith.constant 0.000000e+00 : f32
    %8 = vector.broadcast %cst_4 : f32 to vector<8x128xf32>
    %9 = arith.maximumf %7, %8 : vector<8x128xf32>
    %c48 = arith.constant 48 : index
    %c0_5 = arith.constant 0 : index
    %10 = vector.load %arg2[%c48, %c0_5] : memref<336x128xbf16, #tpu.memory_space<vmem>>, vector<128x128xbf16>
    %c176 = arith.constant 176 : index
    %c0_6 = arith.constant 0 : index
    %11 = vector.load %arg2[%c176, %c0_6] : memref<336x128xbf16, #tpu.memory_space<vmem>>, vector<1x128xbf16>
    %12 = arith.extf %11 : vector<1x128xbf16> to vector<1x128xf32>
    %13 = arith.truncf %9 : vector<8x128xf32> to vector<8x128xbf16>
    %cst_7 = arith.constant dense<0.000000e+00> : vector<8x128xf32>
    %14 = tpu.matmul %13, %10, %cst_7 {dimension_numbers = #tpu.dot_dimension_numbers<[1], [0], [0], [1], [0, 0, 1, 1], [], []>} : vector<8x128xbf16>, vector<128x128xbf16>, vector<8x128xf32> -> vector<8x128xf32>
    %15 = vector.broadcast %12 : vector<1x128xf32> to vector<8x128xf32>
    %16 = arith.addf %14, %15 : vector<8x128xf32>
    %cst_8 = arith.constant 0.000000e+00 : f32
    %17 = vector.broadcast %cst_8 : f32 to vector<8x128xf32>
    %18 = arith.maximumf %16, %17 : vector<8x128xf32>
    %c192 = arith.constant 192 : index
    %c0_9 = arith.constant 0 : index
    %19 = vector.load %arg2[%c192, %c0_9] : memref<336x128xbf16, #tpu.memory_space<vmem>>, vector<128x128xbf16>
    %c320 = arith.constant 320 : index
    %c0_10 = arith.constant 0 : index
    %20 = vector.load %arg2[%c320, %c0_10] : memref<336x128xbf16, #tpu.memory_space<vmem>>, vector<1x128xbf16>
    %21 = arith.extf %20 : vector<1x128xbf16> to vector<1x128xf32>
    %22 = arith.truncf %18 : vector<8x128xf32> to vector<8x128xbf16>
    %cst_11 = arith.constant dense<0.000000e+00> : vector<8x128xf32>
    %23 = tpu.matmul %22, %19, %cst_11 {dimension_numbers = #tpu.dot_dimension_numbers<[1], [0], [0], [1], [0, 0, 1, 1], [], []>} : vector<8x128xbf16>, vector<128x128xbf16>, vector<8x128xf32> -> vector<8x128xf32>
    %24 = vector.broadcast %21 : vector<1x128xf32> to vector<8x128xf32>
    %25 = arith.addf %23, %24 : vector<8x128xf32>
    %c0_12 = arith.constant 0 : index
    %c0_13 = arith.constant 0 : index
    %26 = vector.load %arg3[%c0_12, %c0_13] : memref<8x128xf32, #tpu.memory_space<vmem>>, vector<8x128xf32>
    tpu.vector_store %arg3[%c0_12, %c0_13], %25 {strides = array<i32>} : memref<8x128xf32, #tpu.memory_space<vmem>>, vector<8x128xf32>,
    return
  }
  func.func @transform_0(%arg0: i32) -> (i32, i32) {
    %c0_i32 = arith.constant 0 : i32
    %c0_i32_0 = arith.constant 0 : i32
    return %arg0, %c0_i32 : i32, i32
  }
  func.func @transform_1(%arg0: i32) -> (i32, i32) {
    %c0_i32 = arith.constant 0 : i32
    %c0_i32_0 = arith.constant 0 : i32
    %c0_i32_1 = arith.constant 0 : i32
    return %c0_i32, %c0_i32_0 : i32, i32
  }
  func.func @transform_2(%arg0: i32) -> (i32, i32) {
    %c0_i32 = arith.constant 0 : i32
    %c0_i32_0 = arith.constant 0 : i32
    return %arg0, %c0_i32 : i32, i32
  }
}

</mosaic_0001>

<llo_original>
// kernel: _mlp_forward.1
$region0: #{_mlp_forward.1}
  #allocation0 [shape = 'u32[]', space=smem, size = 0x4, offset = 0x4, fixed_abs, tag = 'smem constant byte address 0x4 - core index']
  #allocation1 [shape = 'u32[144,128]{1,0:T(1,128)}', space=vmem, size = 0x12000, scoped, tag = 'internal scratch']
  %s0 = inlined_call_operand.hbm [shape: f32[8,32], index: 0, kind: input, shape index: {}]
  %s1 = inlined_call_operand.hbm [shape: bf16[336,128], index: 1, kind: input, shape index: {}]
  %s2 = inlined_call_operand.hbm [shape: f32[8,128], index: 2, kind: output, shape index: {}]
  %s3 = sld [smem:[#allocation0]]
  $region26: #{_mlp_forward.1} parent=0
    _
  %s5 = ssub.s32 1, %s3
  %s6 = scalar_select 0, %s5, %s3
  $region1: #{_mlp_forward.1} parent=0
    #allocation2 [shape = 'u8[4096]{0}', space=vmem, size = 0x1000, scoped, tag = 'input window, operand 0, single buffered']
    #allocation3 [shape = 's32[1]{0}', space=sflag, size = 0x4, scoped, tag = 'scoped memory for _mlp_forward.1']
    #allocation4 [shape = 's32[1]{0}', space=sflag, size = 0x4, scoped, tag = 'scoped memory for _mlp_forward.1']
    #allocation5 [shape = 'u8[86016]{0}', space=vmem, size = 0x15000, scoped, tag = 'input window, operand 1, single buffered']
    #allocation6 [shape = 's32[1]{0}', space=sflag, size = 0x4, scoped, tag = 'scoped memory for _mlp_forward.1']
    #allocation7 [shape = 'u8[4096]{0}', space=vmem, size = 0x1000, scoped, tag = 'output window, operand 0, single buffered']
    %7 = vsyncpa [#allocation3], 0
    %8 = vsyncpa [#allocation6], 0
    %9 = vsyncpa [#allocation4], 0
    // Predicated region
    $region2: #{_mlp_forward.1} parent=1 // pred_check
      _
    $region3: #{_mlp_forward.1} parent=1 // pred_check_branch
      %11 = sbr.rel (0) target = $region5
    $region4: #{_mlp_forward.1} parent=1 // pred_region
      %s13 = ssub.s32 128, 128
      %14 = vsyncadd [#allocation3], %s13
      %s16 = sshll.u32 [#allocation2], 4
      %s17 = int_to_ptr.vmem [resolvable:$true] %s16
      %19 = dma.hbm_to_vmem [thread:$0]  %s0, 128, %s17, [#allocation3]
    $region5: #{_mlp_forward.1} parent=1 // pred_fallthru
      _
    // Predicated region
    $region6: #{_mlp_forward.1} parent=1 // pred_check
      _
    $region7: #{_mlp_forward.1} parent=1 // pred_check_branch
      %21 = sbr.rel (0) target = $region9
    $region8: #{_mlp_forward.1} parent=1 // pred_region
      %s23 = ssub.s32 2688, 2688
      %24 = vsyncadd [#allocation6], %s23
      %s25 = sshll.u32 [#allocation5], 4
      %s26 = int_to_ptr.vmem [resolvable:$true] %s25
      %31 = dma.hbm_to_vmem [thread:$0]  %s1, 2688, %s26, [#allocation6], 64, 64, 4
    $region9: #{_mlp_forward.1} parent=1 // pred_fallthru
      _
    // Predicated region
    $region10: #{_mlp_forward.1} parent=1 // pred_check
      _
    $region11: #{_mlp_forward.1} parent=1 // pred_check_branch
      %33 = sbr.rel (0) target = $region13
    $region12: #{_mlp_forward.1} parent=1 // pred_region
      %34 = dma.done [#allocation3], 128
    $region13: #{_mlp_forward.1} parent=1 // pred_fallthru
      _
    // Predicated region
    $region14: #{_mlp_forward.1} parent=1 // pred_check
      _
    $region15: #{_mlp_forward.1} parent=1 // pred_check_branch
      %36 = sbr.rel (0) target = $region17
    $region16: #{_mlp_forward.1} parent=1 // pred_region
      %37 = dma.done [#allocation6], 2688
    $region17: #{_mlp_forward.1} parent=1 // pred_fallthru
      _
    %v39 = vld [vmem:[#allocation2] sm:$0xff]
    %v40 = vld [vmem:[#allocation5] sm:$0xf]
    %v41 = vld [vmem:[#allocation5 + $0x4] sm:$0xf]
    %v42 = vld [vmem:[#allocation5 + $0x8] sm:$0xf]
    %v43 = vld [vmem:[#allocation5 + $0xc] sm:$0xf]
    %v44 = vld [vmem:[#allocation5 + $0x10] sm:$0x1]
    %v45 = vunpack.c.l.bf16 %v44
    %v46 = vpack.c.bf16 %v39, %v39
    %v47 = vlaneseq
    %v48 = vshrl.u32 %v47, 7
    %v49 = vsub.s32 0, %v48
    %v50 = vrot.slane %v45, %v49
    %v55 = vunpack.c.l.b16 %v40
    %v56 = vunpack.c.l.b16 %v41
    %v57 = vunpack.c.l.b16 %v42
    %v58 = vunpack.c.l.b16 %v43
    %v59 = vpack.c.b16 %v56, %v55
    %v60 = vpack.c.b16 %v58, %v57
    %vm63 = vcmask 261120
    %v65 = vsel %vm63, %v46, 0
    %67 = vmatprep.subr.bf16.mxu0 0
    %68 = vmatpush1.bf16.msra.mxu0 0
    %69 = vmatprep.subr.bf16.mxu0 0
    %70 = vmatpush1.bf16.msra.mxu0 0
    %71 = vmatprep.subr.bf16.mxu0 0
    %72 = vmatpush1.bf16.msra.mxu0 0
    %73 = vmatprep.subr.bf16.mxu0 0
    %74 = vmatpush1.bf16.msra.mxu0 0
    %75 = vmatprep.subr.bf16.mxu0 0
    %76 = vmatpush1.bf16.msra.mxu0 0
    %77 = vmatprep.subr.bf16.mxu0 0
    %78 = vmatpush1.bf16.msra.mxu0 0
    %79 = vmatprep.subr.bf16.mxu0 0
    %80 = vmatpush1.bf16.msra.mxu0 %v60
    %81 = vmatprep.subr.bf16.mxu0 0
    %82 = vmatpush1.bf16.msra.mxu0 %v59
    %83 = vmatprep.subr.bf16.mxu0 0
    %84 = vmatpush2.bf16.msra.mxu0 0
    %85 = vmatprep.subr.bf16.mxu0 0
    %86 = vmatpush2.bf16.msra.mxu0 0
    %87 = vmatprep.subr.bf16.mxu0 0
    %88 = vmatpush2.bf16.msra.mxu0 0
    %89 = vmatprep.subr.bf16.mxu0 0
    %90 = vmatpush2.bf16.msra.mxu0 0
    %91 = vmatprep.subr.bf16.mxu0 0
    %92 = vmatpush2.bf16.msra.mxu0 0
    %93 = vmatprep.subr.bf16.mxu0 0
    %94 = vmatpush2.bf16.msra.mxu0 0
    %95 = vmatprep.subr.bf16.mxu0 0
    %96 = vmatpush2.bf16.msra.mxu0 0
    %97 = vmatprep.subr.bf16.mxu0 0
    %98 = vmatpush2.bf16.msra.mxu0 0
    %99 = vmatprep.mubr.bf16.mxu0 0
    %100 = vmatmul.mubr.bf16.gmra.mxu0 %v65
    %v101 = vpop.f32.mrf.mxu0
    %v102 = vadd.f32 %v50, %v101
    %v103 = vpop.f32.mrf.mxu0
    %v104 = vpop.f32.mrf.mxu0
    %v105 = vpop.f32.mrf.mxu0
    %106 = vdwg.mxu0
    %v107 = vmax.f32 %v102, 0.0
    %v108 = vld [vmem:[#allocation5 + $0x18] sm:$0xf]
    %v109 = vld [vmem:[#allocation5 + $0x1c] sm:$0xf]
    %v110 = vld [vmem:[#allocation5 + $0x20] sm:$0xf]
    %v111 = vld [vmem:[#allocation5 + $0x24] sm:$0xf]
    %v112 = vld [vmem:[#allocation5 + $0x28] sm:$0xf]
    %v113 = vld [vmem:[#allocation5 + $0x2c] sm:$0xf]
    %v114 = vld [vmem:[#allocation5 + $0x30] sm:$0xf]
    %v115 = vld [vmem:[#allocation5 + $0x34] sm:$0xf]
    %v116 = vld [vmem:[#allocation5 + $0x38] sm:$0xf]
    %v117 = vld [vmem:[#allocation5 + $0x3c] sm:$0xf]
    %v118 = vld [vmem:[#allocation5 + $0x40] sm:$0xf]
    %v119 = vld [vmem:[#allocation5 + $0x44] sm:$0xf]
    %v120 = vld [vmem:[#allocation5 + $0x48] sm:$0xf]
    %v121 = vld [vmem:[#allocation5 + $0x4c] sm:$0xf]
    %v122 = vld [vmem:[#allocation5 + $0x50] sm:$0xf]
    %v123 = vld [vmem:[#allocation5 + $0x54] sm:$0xf]
    %v124 = vld [vmem:[#allocation5 + $0x58] sm:$0x1]
    %v125 = vunpack.c.l.bf16 %v124
    %v126 = vpack.c.bf16 %v107, %v107
    %v127 = vlaneseq
    %v128 = vshrl.u32 %v127, 7
    %v129 = vsub.s32 0, %v128
    %v130 = vrot.slane %v125, %v129
    %v147 = vunpack.c.l.b16 %v108
    %v148 = vunpack.c.l.b16 %v109
    %v149 = vunpack.c.l.b16 %v110
    %v150 = vunpack.c.l.b16 %v111
    %v151 = vunpack.c.l.b16 %v112
    %v152 = vunpack.c.l.b16 %v113
    %v153 = vunpack.c.l.b16 %v114
    %v154 = vunpack.c.l.b16 %v115
    %v155 = vunpack.c.l.b16 %v116
    %v156 = vunpack.c.l.b16 %v117
    %v157 = vunpack.c.l.b16 %v118
    %v158 = vunpack.c.l.b16 %v119
    %v159 = vunpack.c.l.b16 %v120
    %v160 = vunpack.c.l.b16 %v121
    %v161 = vunpack.c.l.b16 %v122
    %v162 = vunpack.c.l.b16 %v123
    %v163 = vpack.c.b16 %v148, %v147
    %v164 = vpack.c.b16 %v150, %v149
    %v165 = vpack.c.b16 %v152, %v151
    %v166 = vpack.c.b16 %v154, %v153
    %v167 = vpack.c.b16 %v156, %v155
    %v168 = vpack.c.b16 %v158, %v157
    %v169 = vpack.c.b16 %v160, %v159
    %v170 = vpack.c.b16 %v162, %v161
    %179 = vmatprep.subr.bf16.mxu0 0
    %180 = vmatpush1.bf16.msra.mxu0 %v170
    %181 = vmatprep.subr.bf16.mxu0 0
    %182 = vmatpush1.bf16.msra.mxu0 %v169
    %183 = vmatprep.subr.bf16.mxu0 0
    %184 = vmatpush1.bf16.msra.mxu0 %v168
    %185 = vmatprep.subr.bf16.mxu0 0
    %186 = vmatpush1.bf16.msra.mxu0 %v167
    %187 = vmatprep.subr.bf16.mxu0 0
    %188 = vmatpush1.bf16.msra.mxu0 %v166
    %189 = vmatprep.subr.bf16.mxu0 0
    %190 = vmatpush1.bf16.msra.mxu0 %v165
    %191 = vmatprep.subr.bf16.mxu0 0
    %192 = vmatpush1.bf16.msra.mxu0 %v164
    %193 = vmatprep.subr.bf16.mxu0 0
    %194 = vmatpush1.bf16.msra.mxu0 %v163
    %195 = vmatprep.subr.bf16.mxu0 0
    %196 = vmatpush2.bf16.msra.mxu0 0
    %197 = vmatprep.subr.bf16.mxu0 0
    %198 = vmatpush2.bf16.msra.mxu0 0
    %199 = vmatprep.subr.bf16.mxu0 0
    %200 = vmatpush2.bf16.msra.mxu0 0
    %201 = vmatprep.subr.bf16.mxu0 0
    %202 = vmatpush2.bf16.msra.mxu0 0
    %203 = vmatprep.subr.bf16.mxu0 0
    %204 = vmatpush2.bf16.msra.mxu0 0
    %205 = vmatprep.subr.bf16.mxu0 0
    %206 = vmatpush2.bf16.msra.mxu0 0
    %207 = vmatprep.subr.bf16.mxu0 0
    %208 = vmatpush2.bf16.msra.mxu0 0
    %209 = vmatprep.subr.bf16.mxu0 0
    %210 = vmatpush2.bf16.msra.mxu0 0
    %211 = vmatprep.mubr.bf16.mxu0 0
    %212 = vmatmul.mubr.bf16.gmra.mxu0 %v126
    %v213 = vpop.f32.mrf.mxu0
    %v214 = vadd.f32 %v130, %v213
    %v215 = vpop.f32.mrf.mxu0
    %v216 = vpop.f32.mrf.mxu0
    %v217 = vpop.f32.mrf.mxu0
    %218 = vdwg.mxu0
    %v219 = vmax.f32 %v214, 0.0
    %v220 = vld [vmem:[#allocation5 + $0x60] sm:$0xf]
    %v221 = vld [vmem:[#allocation5 + $0x64] sm:$0xf]
    %v222 = vld [vmem:[#allocation5 + $0x68] sm:$0xf]
    %v223 = vld [vmem:[#allocation5 + $0x6c] sm:$0xf]
    %v224 = vld [vmem:[#allocation5 + $0x70] sm:$0xf]
    %v225 = vld [vmem:[#allocation5 + $0x74] sm:$0xf]
    %v226 = vld [vmem:[#allocation5 + $0x78] sm:$0xf]
    %v227 = vld [vmem:[#allocation5 + $0x7c] sm:$0xf]
    %v228 = vld [vmem:[#allocation5 + $0x80] sm:$0xf]
    %v229 = vld [vmem:[#allocation5 + $0x84] sm:$0xf]
    %v230 = vld [vmem:[#allocation5 + $0x88] sm:$0xf]
    %v231 = vld [vmem:[#allocation5 + $0x8c] sm:$0xf]
    %v232 = vld [vmem:[#allocation5 + $0x90] sm:$0xf]
    %v233 = vld [vmem:[#allocation5 + $0x94] sm:$0xf]
    %v234 = vld [vmem:[#allocation5 + $0x98] sm:$0xf]
    %v235 = vld [vmem:[#allocation5 + $0x9c] sm:$0xf]
    %v236 = vld [vmem:[#allocation5 + $0xa0] sm:$0x1]
    %v237 = vunpack.c.l.bf16 %v236
    %v238 = vpack.c.bf16 %v219, %v219
    %v239 = vlaneseq
    %v240 = vshrl.u32 %v239, 7
    %v241 = vsub.s32 0, %v240
    %v242 = vrot.slane %v237, %v241
    %v259 = vunpack.c.l.b16 %v220
    %v260 = vunpack.c.l.b16 %v221
    %v261 = vunpack.c.l.b16 %v222
    %v262 = vunpack.c.l.b16 %v223
    %v263 = vunpack.c.l.b16 %v224
    %v264 = vunpack.c.l.b16 %v225
    %v265 = vunpack.c.l.b16 %v226
    %v266 = vunpack.c.l.b16 %v227
    %v267 = vunpack.c.l.b16 %v228
    %v268 = vunpack.c.l.b16 %v229
    %v269 = vunpack.c.l.b16 %v230
    %v270 = vunpack.c.l.b16 %v231
    %v271 = vunpack.c.l.b16 %v232
    %v272 = vunpack.c.l.b16 %v233
    %v273 = vunpack.c.l.b16 %v234
    %v274 = vunpack.c.l.b16 %v235
    %v275 = vpack.c.b16 %v260, %v259
    %v276 = vpack.c.b16 %v262, %v261
    %v277 = vpack.c.b16 %v264, %v263
    %v278 = vpack.c.b16 %v266, %v265
    %v279 = vpack.c.b16 %v268, %v267
    %v280 = vpack.c.b16 %v270, %v269
    %v281 = vpack.c.b16 %v272, %v271
    %v282 = vpack.c.b16 %v274, %v273
    %291 = vmatprep.subr.bf16.mxu0 0
    %292 = vmatpush1.bf16.msra.mxu0 %v282
    %293 = vmatprep.subr.bf16.mxu0 0
    %294 = vmatpush1.bf16.msra.mxu0 %v281
    %295 = vmatprep.subr.bf16.mxu0 0
    %296 = vmatpush1.bf16.msra.mxu0 %v280
    %297 = vmatprep.subr.bf16.mxu0 0
    %298 = vmatpush1.bf16.msra.mxu0 %v279
    %299 = vmatprep.subr.bf16.mxu0 0
    %300 = vmatpush1.bf16.msra.mxu0 %v278
    %301 = vmatprep.subr.bf16.mxu0 0
    %302 = vmatpush1.bf16.msra.mxu0 %v277
    %303 = vmatprep.subr.bf16.mxu0 0
    %304 = vmatpush1.bf16.msra.mxu0 %v276
    %305 = vmatprep.subr.bf16.mxu0 0
    %306 = vmatpush1.bf16.msra.mxu0 %v275
    %307 = vmatprep.subr.bf16.mxu0 0
    %308 = vmatpush2.bf16.msra.mxu0 0
    %309 = vmatprep.subr.bf16.mxu0 0
    %310 = vmatpush2.bf16.msra.mxu0 0
    %311 = vmatprep.subr.bf16.mxu0 0
    %312 = vmatpush2.bf16.msra.mxu0 0
    %313 = vmatprep.subr.bf16.mxu0 0
    %314 = vmatpush2.bf16.msra.mxu0 0
    %315 = vmatprep.subr.bf16.mxu0 0
    %316 = vmatpush2.bf16.msra.mxu0 0
    %317 = vmatprep.subr.bf16.mxu0 0
    %318 = vmatpush2.bf16.msra.mxu0 0
    %319 = vmatprep.subr.bf16.mxu0 0
    %320 = vmatpush2.bf16.msra.mxu0 0
    %321 = vmatprep.subr.bf16.mxu0 0
    %322 = vmatpush2.bf16.msra.mxu0 0
    %323 = vmatprep.mubr.bf16.mxu0 0
    %324 = vmatmul.mubr.bf16.gmra.mxu0 %v238
    %v325 = vpop.f32.mrf.mxu0
    %v326 = vadd.f32 %v242, %v325
    %v327 = vpop.f32.mrf.mxu0
    %v328 = vpop.f32.mrf.mxu0
    %v329 = vpop.f32.mrf.mxu0
    %330 = vdwg.mxu0
    %331 = vst [vmem:[#allocation7] sm:$0xff] %v326
    // Predicated region
    $region18: #{_mlp_forward.1} parent=1 // pred_check
      _
    $region19: #{_mlp_forward.1} parent=1 // pred_check_branch
      %333 = sbr.rel (0) target = $region21
    $region20: #{_mlp_forward.1} parent=1 // pred_region
      %s335 = ssub.s32 128, 128
      %336 = vsyncadd [#allocation4], %s335
      %s338 = sshll.u32 [#allocation7], 4
      %s339 = int_to_ptr.vmem [resolvable:$true] %s338
      %341 = dma.vmem_to_hbm [thread:$0]  %s339, 128, %s2, [#allocation4]
    $region21: #{_mlp_forward.1} parent=1 // pred_fallthru
      _
    // Predicated region
    $region22: #{_mlp_forward.1} parent=1 // pred_check
      _
    $region23: #{_mlp_forward.1} parent=1 // pred_check_branch
      %343 = sbr.rel (0) target = $region25
    $region24: #{_mlp_forward.1} parent=1 // pred_region
      %344 = dma.done [#allocation4], 128
    $region25: #{_mlp_forward.1} parent=1 // pred_fallthru
      _
    %345 = vsyncpa [#allocation3], 1
    %346 = vsyncpa [#allocation6], 1
    %347 = vsyncpa [#allocation4], 1

// kernel: _mlp_forward.1
$region0: #{_mlp_forward.1}
  #allocation0 [shape = 'u32[]', space=smem, size = 0x4, offset = 0x4, fixed_abs, tag = 'smem constant byte address 0x4 - core index']
  #allocation1 [shape = 'u32[144,128]{1,0:T(1,128)}', space=vmem, size = 0x12000, scoped, tag = 'internal scratch']
  %s0 = inlined_call_operand.hbm [shape: f32[8,32], index: 0, kind: input, shape index: {}]
  %s1 = inlined_call_operand.hbm [shape: bf16[336,128], index: 1, kind: input, shape index: {}]
  %s2 = inlined_call_operand.hbm [shape: f32[8,128], index: 2, kind: output, shape index: {}]
  %s3 = sld [smem:[#allocation0]]
  $region26: #{_mlp_forward.1} parent=0
    _
  %s5 = ssub.s32 1, %s3
  %s6 = scalar_select 0, %s5, %s3
  $region1: #{_mlp_forward.1} parent=0
    #allocation2 [shape = 'u8[4096]{0}', space=vmem, size = 0x1000, scoped, tag = 'input window, operand 0, single buffered']
    #allocation3 [shape = 's32[1]{0}', space=sflag, size = 0x4, scoped, tag = 'scoped memory for _mlp_forward.1']
    #allocation4 [shape = 's32[1]{0}', space=sflag, size = 0x4, scoped, tag = 'scoped memory for _mlp_forward.1']
    #allocation5 [shape = 'u8[86016]{0}', space=vmem, size = 0x15000, scoped, tag = 'input window, operand 1, single buffered']
    #allocation6 [shape = 's32[1]{0}', space=sflag, size = 0x4, scoped, tag = 'scoped memory for _mlp_forward.1']
    #allocation7 [shape = 'u8[4096]{0}', space=vmem, size = 0x1000, scoped, tag = 'output window, operand 0, single buffered']
    %7 = vsyncpa [#allocation3], 0
    %8 = vsyncpa [#allocation6], 0
    %9 = vsyncpa [#allocation4], 0
    // Predicated region
    $region2: #{_mlp_forward.1} parent=1 // pred_check
      _
    $region3: #{_mlp_forward.1} parent=1 // pred_check_branch
      %11 = sbr.rel (0) target = $region5
    $region4: #{_mlp_forward.1} parent=1 // pred_region
      %s13 = ssub.s32 128, 128
      %14 = vsyncadd [#allocation3], %s13
      %s16 = sshll.u32 [#allocation2], 4
      %s17 = int_to_ptr.vmem [resolvable:$true] %s16
      %19 = dma.hbm_to_vmem [thread:$0]  %s0, 128, %s17, [#allocation3]
    $region5: #{_mlp_forward.1} parent=1 // pred_fallthru
      _
    // Predicated region
    $region6: #{_mlp_forward.1} parent=1 // pred_check
      _
    $region7: #{_mlp_forward.1} parent=1 // pred_check_branch
      %21 = sbr.rel (0) target = $region9
    $region8: #{_mlp_forward.1} parent=1 // pred_region
      %s23 = ssub.s32 2688, 2688
      %24 = vsyncadd [#allocation6], %s23
      %s25 = sshll.u32 [#allocation5], 4
      %s26 = int_to_ptr.vmem [resolvable:$true] %s25
      %31 = dma.hbm_to_vmem [thread:$0]  %s1, 2688, %s26, [#allocation6], 64, 64, 4
    $region9: #{_mlp_forward.1} parent=1 // pred_fallthru
      _
    // Predicated region
    $region10: #{_mlp_forward.1} parent=1 // pred_check
      _
    $region11: #{_mlp_forward.1} parent=1 // pred_check_branch
      %33 = sbr.rel (0) target = $region13
    $region12: #{_mlp_forward.1} parent=1 // pred_region
      %34 = dma.done [#allocation3], 128
    $region13: #{_mlp_forward.1} parent=1 // pred_fallthru
      _
    // Predicated region
    $region14: #{_mlp_forward.1} parent=1 // pred_check
      _
    $region15: #{_mlp_forward.1} parent=1 // pred_check_branch
      %36 = sbr.rel (0) target = $region17
    $region16: #{_mlp_forward.1} parent=1 // pred_region
      %37 = dma.done [#allocation6], 2688
    $region17: #{_mlp_forward.1} parent=1 // pred_fallthru
      _
    %v39 = vld [vmem:[#allocation2] sm:$0xff]
    %v40 = vld [vmem:[#allocation5] sm:$0xf]
    %v41 = vld [vmem:[#allocation5 + $0x4] sm:$0xf]
    %v42 = vld [vmem:[#allocation5 + $0x8] sm:$0xf]
    %v43 = vld [vmem:[#allocation5 + $0xc] sm:$0xf]
    %v44 = vld [vmem:[#allocation5 + $0x10] sm:$0x1]
    %v45 = vunpack.c.l.bf16 %v44
    %v46 = vpack.c.bf16 %v39, %v39
    %v47 = vlaneseq
    %v48 = vshrl.u32 %v47, 7
    %v49 = vsub.s32 0, %v48
    %v50 = vrot.slane %v45, %v49
    %v55 = vunpack.c.l.b16 %v40
    %v56 = vunpack.c.l.b16 %v41
    %v57 = vunpack.c.l.b16 %v42
    %v58 = vunpack.c.l.b16 %v43
    %v59 = vpack.c.b16 %v56, %v55
    %v60 = vpack.c.b16 %v58, %v57
    %vm63 = vcmask 261120
    %v65 = vsel %vm63, %v46, 0
    %67 = vmatprep.subr.bf16.mxu0 0
    %68 = vmatpush1.bf16.msra.mxu0 0
    %69 = vmatprep.subr.bf16.mxu0 0
    %70 = vmatpush1.bf16.msra.mxu0 0
    %71 = vmatprep.subr.bf16.mxu0 0
    %72 = vmatpush1.bf16.msra.mxu0 0
    %73 = vmatprep.subr.bf16.mxu0 0
    %74 = vmatpush1.bf16.msra.mxu0 0
    %75 = vmatprep.subr.bf16.mxu0 0
    %76 = vmatpush1.bf16.msra.mxu0 0
    %77 = vmatprep.subr.bf16.mxu0 0
    %78 = vmatpush1.bf16.msra.mxu0 0
    %79 = vmatprep.subr.bf16.mxu0 0
    %80 = vmatpush1.bf16.msra.mxu0 %v60
    %81 = vmatprep.subr.bf16.mxu0 0
    %82 = vmatpush1.bf16.msra.mxu0 %v59
    %83 = vmatprep.subr.bf16.mxu0 0
    %84 = vmatpush2.bf16.msra.mxu0 0
    %85 = vmatprep.subr.bf16.mxu0 0
    %86 = vmatpush2.bf16.msra.mxu0 0
    %87 = vmatprep.subr.bf16.mxu0 0
    %88 = vmatpush2.bf16.msra.mxu0 0
    %89 = vmatprep.subr.bf16.mxu0 0
    %90 = vmatpush2.bf16.msra.mxu0 0
    %91 = vmatprep.subr.bf16.mxu0 0
    %92 = vmatpush2.bf16.msra.mxu0 0
    %93 = vmatprep.subr.bf16.mxu0 0
    %94 = vmatpush2.bf16.msra.mxu0 0
    %95 = vmatprep.subr.bf16.mxu0 0
    %96 = vmatpush2.bf16.msra.mxu0 0
    %97 = vmatprep.subr.bf16.mxu0 0
    %98 = vmatpush2.bf16.msra.mxu0 0
    %99 = vmatprep.mubr.bf16.mxu0 0
    %100 = vmatmul.mubr.bf16.gmra.mxu0 %v65
    %v101 = vpop.f32.mrf.mxu0
    %v102 = vadd.f32 %v50, %v101
    %v103 = vpop.f32.mrf.mxu0
    %v104 = vpop.f32.mrf.mxu0
    %v105 = vpop.f32.mrf.mxu0
    %106 = vdwg.mxu0
    %v107 = vmax.f32 %v102, 0.0
    %v108 = vld [vmem:[#allocation5 + $0x18] sm:$0xf]
    %v109 = vld [vmem:[#allocation5 + $0x1c] sm:$0xf]
    %v110 = vld [vmem:[#allocation5 + $0x20] sm:$0xf]
    %v111 = vld [vmem:[#allocation5 + $0x24] sm:$0xf]
    %v112 = vld [vmem:[#allocation5 + $0x28] sm:$0xf]
    %v113 = vld [vmem:[#allocation5 + $0x2c] sm:$0xf]
    %v114 = vld [vmem:[#allocation5 + $0x30] sm:$0xf]
    %v115 = vld [vmem:[#allocation5 + $0x34] sm:$0xf]
    %v116 = vld [vmem:[#allocation5 + $0x38] sm:$0xf]
    %v117 = vld [vmem:[#allocation5 + $0x3c] sm:$0xf]
    %v118 = vld [vmem:[#allocation5 + $0x40] sm:$0xf]
    %v119 = vld [vmem:[#allocation5 + $0x44] sm:$0xf]
    %v120 = vld [vmem:[#allocation5 + $0x48] sm:$0xf]
    %v121 = vld [vmem:[#allocation5 + $0x4c] sm:$0xf]
    %v122 = vld [vmem:[#allocation5 + $0x50] sm:$0xf]
    %v123 = vld [vmem:[#allocation5 + $0x54] sm:$0xf]
    %v124 = vld [vmem:[#allocation5 + $0x58] sm:$0x1]
    %v125 = vunpack.c.l.bf16 %v124
    %v126 = vpack.c.bf16 %v107, %v107
    %v127 = vlaneseq
    %v128 = vshrl.u32 %v127, 7
    %v129 = vsub.s32 0, %v128
    %v130 = vrot.slane %v125, %v129
    %v147 = vunpack.c.l.b16 %v108
    %v148 = vunpack.c.l.b16 %v109
    %v149 = vunpack.c.l.b16 %v110
    %v150 = vunpack.c.l.b16 %v111
    %v151 = vunpack.c.l.b16 %v112
    %v152 = vunpack.c.l.b16 %v113
    %v153 = vunpack.c.l.b16 %v114
    %v154 = vunpack.c.l.b16 %v115
    %v155 = vunpack.c.l.b16 %v116
    %v156 = vunpack.c.l.b16 %v117
    %v157 = vunpack.c.l.b16 %v118
    %v158 = vunpack.c.l.b16 %v119
    %v159 = vunpack.c.l.b16 %v120
    %v160 = vunpack.c.l.b16 %v121
    %v161 = vunpack.c.l.b16 %v122
    %v162 = vunpack.c.l.b16 %v123
    %v163 = vpack.c.b16 %v148, %v147
    %v164 = vpack.c.b16 %v150, %v149
    %v165 = vpack.c.b16 %v152, %v151
    %v166 = vpack.c.b16 %v154, %v153
    %v167 = vpack.c.b16 %v156, %v155
    %v168 = vpack.c.b16 %v158, %v157
    %v169 = vpack.c.b16 %v160, %v159
    %v170 = vpack.c.b16 %v162, %v161
    %179 = vmatprep.subr.bf16.mxu0 0
    %180 = vmatpush1.bf16.msra.mxu0 %v170
    %181 = vmatprep.subr.bf16.mxu0 0
    %182 = vmatpush1.bf16.msra.mxu0 %v169
    %183 = vmatprep.subr.bf16.mxu0 0
    %184 = vmatpush1.bf16.msra.mxu0 %v168
    %185 = vmatprep.subr.bf16.mxu0 0
    %186 = vmatpush1.bf16.msra.mxu0 %v167
    %187 = vmatprep.subr.bf16.mxu0 0
    %188 = vmatpush1.bf16.msra.mxu0 %v166
    %189 = vmatprep.subr.bf16.mxu0 0
    %190 = vmatpush1.bf16.msra.mxu0 %v165
    %191 = vmatprep.subr.bf16.mxu0 0
    %192 = vmatpush1.bf16.msra.mxu0 %v164
    %193 = vmatprep.subr.bf16.mxu0 0
    %194 = vmatpush1.bf16.msra.mxu0 %v163
    %195 = vmatprep.subr.bf16.mxu0 0
    %196 = vmatpush2.bf16.msra.mxu0 0
    %197 = vmatprep.subr.bf16.mxu0 0
    %198 = vmatpush2.bf16.msra.mxu0 0
    %199 = vmatprep.subr.bf16.mxu0 0
    %200 = vmatpush2.bf16.msra.mxu0 0
    %201 = vmatprep.subr.bf16.mxu0 0
    %202 = vmatpush2.bf16.msra.mxu0 0
    %203 = vmatprep.subr.bf16.mxu0 0
    %204 = vmatpush2.bf16.msra.mxu0 0
    %205 = vmatprep.subr.bf16.mxu0 0
    %206 = vmatpush2.bf16.msra.mxu0 0
    %207 = vmatprep.subr.bf16.mxu0 0
    %208 = vmatpush2.bf16.msra.mxu0 0
    %209 = vmatprep.subr.bf16.mxu0 0
    %210 = vmatpush2.bf16.msra.mxu0 0
    %211 = vmatprep.mubr.bf16.mxu0 0
    %212 = vmatmul.mubr.bf16.gmra.mxu0 %v126
    %v213 = vpop.f32.mrf.mxu0
    %v214 = vadd.f32 %v130, %v213
    %v215 = vpop.f32.mrf.mxu0
    %v216 = vpop.f32.mrf.mxu0
    %v217 = vpop.f32.mrf.mxu0
    %218 = vdwg.mxu0
    %v219 = vmax.f32 %v214, 0.0
    %v220 = vld [vmem:[#allocation5 + $0x60] sm:$0xf]
    %v221 = vld [vmem:[#allocation5 + $0x64] sm:$0xf]
    %v222 = vld [vmem:[#allocation5 + $0x68] sm:$0xf]
    %v223 = vld [vmem:[#allocation5 + $0x6c] sm:$0xf]
    %v224 = vld [vmem:[#allocation5 + $0x70] sm:$0xf]
    %v225 = vld [vmem:[#allocation5 + $0x74] sm:$0xf]
    %v226 = vld [vmem:[#allocation5 + $0x78] sm:$0xf]
    %v227 = vld [vmem:[#allocation5 + $0x7c] sm:$0xf]
    %v228 = vld [vmem:[#allocation5 + $0x80] sm:$0xf]
    %v229 = vld [vmem:[#allocation5 + $0x84] sm:$0xf]
    %v230 = vld [vmem:[#allocation5 + $0x88] sm:$0xf]
    %v231 = vld [vmem:[#allocation5 + $0x8c] sm:$0xf]
    %v232 = vld [vmem:[#allocation5 + $0x90] sm:$0xf]
    %v233 = vld [vmem:[#allocation5 + $0x94] sm:$0xf]
    %v234 = vld [vmem:[#allocation5 + $0x98] sm:$0xf]
    %v235 = vld [vmem:[#allocation5 + $0x9c] sm:$0xf]
    %v236 = vld [vmem:[#allocation5 + $0xa0] sm:$0x1]
    %v237 = vunpack.c.l.bf16 %v236
    %v238 = vpack.c.bf16 %v219, %v219
    %v239 = vlaneseq
    %v240 = vshrl.u32 %v239, 7
    %v241 = vsub.s32 0, %v240
    %v242 = vrot.slane %v237, %v241
    %v259 = vunpack.c.l.b16 %v220
    %v260 = vunpack.c.l.b16 %v221
    %v261 = vunpack.c.l.b16 %v222
    %v262 = vunpack.c.l.b16 %v223
    %v263 = vunpack.c.l.b16 %v224
    %v264 = vunpack.c.l.b16 %v225
    %v265 = vunpack.c.l.b16 %v226
    %v266 = vunpack.c.l.b16 %v227
    %v267 = vunpack.c.l.b16 %v228
    %v268 = vunpack.c.l.b16 %v229
    %v269 = vunpack.c.l.b16 %v230
    %v270 = vunpack.c.l.b16 %v231
    %v271 = vunpack.c.l.b16 %v232
    %v272 = vunpack.c.l.b16 %v233
    %v273 = vunpack.c.l.b16 %v234
    %v274 = vunpack.c.l.b16 %v235
    %v275 = vpack.c.b16 %v260, %v259
    %v276 = vpack.c.b16 %v262, %v261
    %v277 = vpack.c.b16 %v264, %v263
    %v278 = vpack.c.b16 %v266, %v265
    %v279 = vpack.c.b16 %v268, %v267
    %v280 = vpack.c.b16 %v270, %v269
    %v281 = vpack.c.b16 %v272, %v271
    %v282 = vpack.c.b16 %v274, %v273
    %291 = vmatprep.subr.bf16.mxu0 0
    %292 = vmatpush1.bf16.msra.mxu0 %v282
    %293 = vmatprep.subr.bf16.mxu0 0
    %294 = vmatpush1.bf16.msra.mxu0 %v281
    %295 = vmatprep.subr.bf16.mxu0 0
    %296 = vmatpush1.bf16.msra.mxu0 %v280
    %297 = vmatprep.subr.bf16.mxu0 0
    %298 = vmatpush1.bf16.msra.mxu0 %v279
    %299 = vmatprep.subr.bf16.mxu0 0
    %300 = vmatpush1.bf16.msra.mxu0 %v278
    %301 = vmatprep.subr.bf16.mxu0 0
    %302 = vmatpush1.bf16.msra.mxu0 %v277
    %303 = vmatprep.subr.bf16.mxu0 0
    %304 = vmatpush1.bf16.msra.mxu0 %v276
    %305 = vmatprep.subr.bf16.mxu0 0
    %306 = vmatpush1.bf16.msra.mxu0 %v275
    %307 = vmatprep.subr.bf16.mxu0 0
    %308 = vmatpush2.bf16.msra.mxu0 0
    %309 = vmatprep.subr.bf16.mxu0 0
    %310 = vmatpush2.bf16.msra.mxu0 0
    %311 = vmatprep.subr.bf16.mxu0 0
    %312 = vmatpush2.bf16.msra.mxu0 0
    %313 = vmatprep.subr.bf16.mxu0 0
    %314 = vmatpush2.bf16.msra.mxu0 0
    %315 = vmatprep.subr.bf16.mxu0 0
    %316 = vmatpush2.bf16.msra.mxu0 0
    %317 = vmatprep.subr.bf16.mxu0 0
    %318 = vmatpush2.bf16.msra.mxu0 0
    %319 = vmatprep.subr.bf16.mxu0 0
    %320 = vmatpush2.bf16.msra.mxu0 0
    %321 = vmatprep.subr.bf16.mxu0 0
    %322 = vmatpush2.bf16.msra.mxu0 0
    %323 = vmatprep.mubr.bf16.mxu0 0
    %324 = vmatmul.mubr.bf16.gmra.mxu0 %v238
    %v325 = vpop.f32.mrf.mxu0
    %v326 = vadd.f32 %v242, %v325
    %v327 = vpop.f32.mrf.mxu0
    %v328 = vpop.f32.mrf.mxu0
    %v329 = vpop.f32.mrf.mxu0
    %330 = vdwg.mxu0
    %331 = vst [vmem:[#allocation7] sm:$0xff] %v326
    // Predicated region
    $region18: #{_mlp_forward.1} parent=1 // pred_check
      _
    $region19: #{_mlp_forward.1} parent=1 // pred_check_branch
      %333 = sbr.rel (0) target = $region21
    $region20: #{_mlp_forward.1} parent=1 // pred_region
      %s335 = ssub.s32 128, 128
      %336 = vsyncadd [#allocation4], %s335
      %s338 = sshll.u32 [#allocation7], 4
      %s339 = int_to_ptr.vmem [resolvable:$true] %s338
      %341 = dma.vmem_to_hbm [thread:$0]  %s339, 128, %s2, [#allocation4]
    $region21: #{_mlp_forward.1} parent=1 // pred_fallthru
      _
    // Predicated region
    $region22: #{_mlp_forward.1} parent=1 // pred_check
      _
    $region23: #{_mlp_forward.1} parent=1 // pred_check_branch
      %343 = sbr.rel (0) target = $region25
    $region24: #{_mlp_forward.1} parent=1 // pred_region
      %344 = dma.done [#allocation4], 128
    $region25: #{_mlp_forward.1} parent=1 // pred_fallthru
      _
    %345 = vsyncpa [#allocation3], 1
    %346 = vsyncpa [#allocation6], 1
    %347 = vsyncpa [#allocation4], 1

</llo_original>
